<compile_context>
chip_gen: v5e
topology: v5e:2x2
jax: 0.10.0
libtpu: 0.0.40
codegen_flags: <defaults>
</compile_context>

<pallas_src>
import functools

import jax
import jax.numpy as jnp
from jax import lax
from jax.experimental import pallas as pl
from jax.experimental.pallas import tpu as pltpu


def _transition_kernel(x_ref, scale_ref, shift_ref, w_ref, o_ref, *, TH, W):
    # x_ref:     (1, Cin, TH*W)       channels-first row tile, spatial flattened
    # scale_ref: (Cin, 1)             folded BN scale  = gamma / sqrt(var + eps)
    # shift_ref: (Cin, 1)             folded BN shift  = beta - mean * scale
    # w_ref:     (Cout_pad, Cin)      1x1 conv weight (matmul dtype, Cout padded)
    # o_ref:     (1, Cout_pad, (TH//2)*(W//2))   flattened-NCHW output tile

    # BatchNorm (inference) + ReLU in f32 vregs, channels-first.
    x = x_ref[0].astype(jnp.float32)                           # (Cin, TH*W)
    y = jnp.maximum(x * scale_ref[...] + shift_ref[...], 0.0)

    # Single in-VMEM 2-D transpose: channels onto the lane axis (no HBM traffic).
    y = y.T                                                    # (TH*W, Cin)

    # AvgPool2d(2, 2) BEFORE the 1x1 conv (pool and conv are both linear, so
    # they commute) -> 4x fewer MXU flops. Done as shifted adds on split,
    # non-lane axes (channel/lane dim stays intact the whole time).
    y = y.reshape(TH, W // 2, 2, Cin)
    y = y[:, :, 0, :] + y[:, :, 1, :]                          # pool along W
    y = y.reshape(TH // 2, 2, W // 2, Cin)
    y = (y[:, 0] + y[:, 1]) * 0.25                             # pool along H
    p = y.reshape((TH // 2) * (W // 2), Cin).astype(w_ref.dtype)   # (S_out, Cin)

    # Dropout2d: identity in eval mode (deterministic forward).
    # TODO(synk): training-mode channelwise dropout (torch RNG parity) not implemented.

    # 1x1 conv == channel matmul. 'NT' contraction (contract over Cin on both
    # operands) yields (Cout_pad, S_out) directly in the flattened-NCHW output
    # layout, so the store is lane-dense and needs no further reshape/transpose.
    z = lax.dot_general(w_ref[...], p, (((1,), (1,)), ((), ())),
                        preferred_element_type=jnp.float32)    # (Cout_pad, S_out)
    o_ref[0] = z.astype(o_ref.dtype)


def _pick_row_tile(H, W, Cin, itemsize, max_rows=32, max_tile_bytes=4 << 20):
    """Largest even row tile TH dividing H such that both the flattened input
    block (TH*W) and output block ((TH//2)*(W//2)) stay 128-lane aligned and
    the input tile stays under a modest VMEM byte budget.  Falls back to the
    whole image (TH = H), which always satisfies the full-extent BlockSpec rule."""
    best = H
    for th in range(2, min(H, max_rows) + 1, 2):
        if H % th:
            continue
        if (th * W) % 128 or ((th // 2) * (W // 2)) % 128:
            continue
        if th * W * Cin * itemsize > max_tile_bytes:
            continue
        best = th
    return best


def transition_layer(x_nchw, gamma, beta, running_mean, running_var, conv_w,
                     eps=1e-5, drop_rate=0.0, matmul_dtype=jnp.bfloat16):
    """x_nchw: (N, Cin, H, W). conv_w: (Cout, Cin, 1, 1). Returns (N, Cout, H//2, W//2)."""
    N, Cin, H, W = x_nchw.shape
    Cout = conv_w.shape[0]
    assert conv_w.shape == (Cout, Cin, 1, 1)
    assert H % 2 == 0 and W % 2 == 0
    del drop_rate  # Dropout2d is identity in eval mode.

    # Fold BN (inference stats) into a per-channel affine.
    scale = (gamma / jnp.sqrt(running_var + eps)).astype(jnp.float32)
    shift = (beta - running_mean * scale).astype(jnp.float32)
    scale2 = scale.reshape(Cin, 1)
    shift2 = shift.reshape(Cin, 1)

    # 1x1 conv weight in the matmul dtype, Cout padded to lane/MXU granularity
    # (a no-op for real DenseNet transitions where Cout is already >= 128).
    cout_pad = ((Cout + 127) // 128) * 128
    w = conv_w.reshape(Cout, Cin).astype(matmul_dtype)
    if cout_pad != Cout:
        w = jnp.pad(w, ((0, cout_pad - Cout), (0, 0)))
    # TODO(synk): Cin (matmul K dim) is left un-padded; padding it would require
    # padding the activations in HBM, which costs more than ragged K.

    TH = _pick_row_tile(H, W, Cin, x_nchw.dtype.itemsize)
    n_row_tiles = H // TH
    s_in = TH * W
    s_out = (TH // 2) * (W // 2)
    s_total = (H // 2) * (W // 2)

    # Free (contiguous) reshape: flatten spatial so row tiles are lane-dense and
    # no NCHW<->NHWC transpose ever touches HBM.
    x_flat = x_nchw.reshape(N, Cin, H * W)

    kernel = functools.partial(_transition_kernel, TH=TH, W=W)

    cost = pl.CostEstimate(
        flops=2 * N * s_total * Cin * cout_pad,
        transcendentals=0,
        bytes_accessed=(x_flat.size * x_flat.dtype.itemsize
                        + w.size * w.dtype.itemsize
                        + scale2.size * 4 + shift2.size * 4
                        + N * cout_pad * s_total * x_nchw.dtype.itemsize),
    )

    out_flat = pl.pallas_call(
        kernel,
        out_shape=jax.ShapeDtypeStruct((N, cout_pad, s_total), x_nchw.dtype),
        grid_spec=pltpu.PrefetchScalarGridSpec(
            num_scalar_prefetch=0,
            grid=(N, n_row_tiles),
            in_specs=[
                pl.BlockSpec((1, Cin, s_in), lambda n, h: (n, 0, h)),
                pl.BlockSpec((Cin, 1), lambda n, h: (0, 0)),
                pl.BlockSpec((Cin, 1), lambda n, h: (0, 0)),
                pl.BlockSpec((cout_pad, Cin), lambda n, h: (0, 0)),
            ],
            out_specs=pl.BlockSpec((1, cout_pad, s_out), lambda n, h: (n, 0, h)),
        ),
        compiler_params=pltpu.CompilerParams(
            dimension_semantics=("parallel", "parallel"),
            vmem_limit_bytes=48 * 1024 * 1024,   # budget under v7x's 64 MiB VMEM
        ),
        cost_estimate=cost,
    )(x_flat, scale2, shift2, w)

    # Strip the Cout padding (cheap: output is ~8x smaller than the input) and
    # restore the 4-D NCHW view with a free, contiguous reshape.
    return out_flat[:, :Cout, :].reshape(N, Cout, H // 2, W // 2)


def _reference(x_nchw, gamma, beta, running_mean, running_var, conv_w, eps=1e-5):
    # Pure-JAX reference with the same eval-mode semantics (conv before pool).
    inv = 1.0 / jnp.sqrt(running_var + eps)
    xb = (x_nchw - running_mean[None, :, None, None]) * inv[None, :, None, None]
    xb = xb * gamma[None, :, None, None] + beta[None, :, None, None]
    xr = jnp.maximum(xb, 0.0)
    y = jnp.einsum("nchw,oc->nohw", xr,
                   conv_w.reshape(conv_w.shape[0], conv_w.shape[1]))
    N, Co, H, W = y.shape
    return y.reshape(N, Co, H // 2, 2, W // 2, 2).mean(axis=(3, 5))


if __name__ == "__main__":
    # Small shapes consistent with the module: a transition halves the channels.
    N, Cin, H, W, Cout = 2, 8, 16, 16, 4

    key = jax.random.PRNGKey(0)
    kx, kg, kb, km, kv, kw = jax.random.split(key, 6)

    x = jax.random.normal(kx, (N, Cin, H, W), dtype=jnp.float32)
    gamma = jax.random.normal(kg, (Cin,), dtype=jnp.float32) * 0.1 + 1.0
    beta = jax.random.normal(kb, (Cin,), dtype=jnp.float32) * 0.1
    running_mean = jax.random.normal(km, (Cin,), dtype=jnp.float32) * 0.1
    running_var = jnp.abs(jax.random.normal(kv, (Cin,), dtype=jnp.float32)) * 0.1 + 1.0
    conv_w = jax.random.normal(kw, (Cout, Cin, 1, 1), dtype=jnp.float32) * 0.1

    ref = _reference(x, gamma, beta, running_mean, running_var, conv_w)

    # f32 MXU path: matches the reference tightly (pool/conv commute only
    # changes the f32 rounding order).
    out_f32 = transition_layer(x, gamma, beta, running_mean, running_var, conv_w,
                               matmul_dtype=jnp.float32)
    out_f32 = jax.block_until_ready(out_f32)
    assert out_f32.shape == (N, Cout, H // 2, W // 2), out_f32.shape
    assert jnp.allclose(out_f32, ref, atol=1e-5, rtol=1e-5), \
        float(jnp.max(jnp.abs(out_f32 - ref)))

    # Default bf16 MXU path (halves matmul-operand bytes, bf16-native MXU);
    # tolerance loosened for bf16 rounding.
    out_bf16 = transition_layer(x, gamma, beta, running_mean, running_var, conv_w)
    out_bf16 = jax.block_until_ready(out_bf16)
    assert out_bf16.shape == (N, Cout, H // 2, W // 2), out_bf16.shape
    assert jnp.allclose(out_bf16, ref, atol=2e-2, rtol=2e-2), \
        float(jnp.max(jnp.abs(out_bf16 - ref)))

    print("KERNEL_OK")
</pallas_src>

<mosaic_0001>
module attributes {stable_mosaic.version = 11 : i64} {
  func.func @_transition_kernel(%arg0: i32, %arg1: i32, %arg2: memref<1x8x256xf32, #tpu.memory_space<vmem>>, %arg3: memref<8x1xf32, #tpu.memory_space<vmem>>, %arg4: memref<8x1xf32, #tpu.memory_space<vmem>>, %arg5: memref<128x8xf32, #tpu.memory_space<vmem>>, %arg6: memref<1x128x64xf32, #tpu.memory_space<vmem>>) attributes {dimension_semantics = [#tpu.dimension_semantics<parallel>, #tpu.dimension_semantics<parallel>], iteration_bounds = array<i64: 2, 1>, scalar_prefetch = 0 : i64, scratch_operands = 0 : i64, tpu.core_type = #tpu.core_type<tc>, window_params = [{transform_indices = @transform_0, window_bounds = array<i64: 1, 8, 256>}, {pipeline_mode = #tpu.pipeline_mode<synchronous>, transform_indices = @transform_1, window_bounds = array<i64: 8, 1>}, {pipeline_mode = #tpu.pipeline_mode<synchronous>, transform_indices = @transform_2, window_bounds = array<i64: 8, 1>}, {pipeline_mode = #tpu.pipeline_mode<synchronous>, transform_indices = @transform_3, window_bounds = array<i64: 128, 8>}, {transform_indices = @transform_4, window_bounds = array<i64: 1, 128, 64>}]} {
    %c0 = arith.constant 0 : index
    %c0_0 = arith.constant 0 : index
    %c0_1 = arith.constant 0 : index
    %0 = vector.load %arg2[%c0, %c0_0, %c0_1] : memref<1x8x256xf32, #tpu.memory_space<vmem>>, vector<1x8x256xf32>
    %1 = vector.shape_cast %0 : vector<1x8x256xf32> to vector<8x256xf32>
    %c0_2 = arith.constant 0 : index
    %c0_3 = arith.constant 0 : index
    %2 = vector.load %arg3[%c0_2, %c0_3] : memref<8x1xf32, #tpu.memory_space<vmem>>, vector<8x1xf32>
    %3 = vector.broadcast %2 : vector<8x1xf32> to vector<8x256xf32>
    %4 = arith.mulf %1, %3 : vector<8x256xf32>
    %c0_4 = arith.constant 0 : index
    %c0_5 = arith.constant 0 : index
    %5 = vector.load %arg4[%c0_4, %c0_5] : memref<8x1xf32, #tpu.memory_space<vmem>>, vector<8x1xf32>
    %6 = vector.broadcast %5 : vector<8x1xf32> to vector<8x256xf32>
    %7 = arith.addf %4, %6 : vector<8x256xf32>
    %cst = arith.constant 0.000000e+00 : f32
    %8 = vector.broadcast %cst : f32 to vector<8x256xf32>
    %9 = arith.maximumf %7, %8 : vector<8x256xf32>
    %10 = tpu.transpose %9, [1, 0] : vector<8x256xf32> -> vector<256x8xf32>
    %11 = vector.shape_cast %10 : vector<256x8xf32> to vector<16x8x2x8xf32>
    %12 = vector.extract_strided_slice %11 {offsets = [0, 0, 0, 0], sizes = [16, 8, 1, 8], strides = [1, 1, 1, 1]} : vector<16x8x2x8xf32> to vector<16x8x1x8xf32>
    %13 = vector.shape_cast %12 : vector<16x8x1x8xf32> to vector<16x8x8xf32>
    %14 = vector.extract_strided_slice %11 {offsets = [0, 0, 1, 0], sizes = [16, 8, 1, 8], strides = [1, 1, 1, 1]} : vector<16x8x2x8xf32> to vector<16x8x1x8xf32>
    %15 = vector.shape_cast %14 : vector<16x8x1x8xf32> to vector<16x8x8xf32>
    %16 = arith.addf %13, %15 : vector<16x8x8xf32>
    %17 = vector.shape_cast %16 : vector<16x8x8xf32> to vector<8x2x8x8xf32>
    %18 = vector.extract_strided_slice %17 {offsets = [0, 0, 0, 0], sizes = [8, 1, 8, 8], strides = [1, 1, 1, 1]} : vector<8x2x8x8xf32> to vector<8x1x8x8xf32>
    %19 = vector.shape_cast %18 : vector<8x1x8x8xf32> to vector<8x8x8xf32>
    %20 = vector.extract_strided_slice %17 {offsets = [0, 1, 0, 0], sizes = [8, 1, 8, 8], strides = [1, 1, 1, 1]} : vector<8x2x8x8xf32> to vector<8x1x8x8xf32>
    %21 = vector.shape_cast %20 : vector<8x1x8x8xf32> to vector<8x8x8xf32>
    %22 = arith.addf %19, %21 : vector<8x8x8xf32>
    %cst_6 = arith.constant 2.500000e-01 : f32
    %23 = vector.broadcast %cst_6 : f32 to vector<8x8x8xf32>
    %24 = arith.mulf %22, %23 : vector<8x8x8xf32>
    %25 = vector.shape_cast %24 : vector<8x8x8xf32> to vector<64x8xf32>
    %c0_7 = arith.constant 0 : index
    %c0_8 = arith.constant 0 : index
    %26 = vector.load %arg5[%c0_7, %c0_8] : memref<128x8xf32, #tpu.memory_space<vmem>>, vector<128x8xf32>
    %cst_9 = arith.constant dense<0.000000e+00> : vector<128x64xf32>
    %27 = tpu.matmul %26, %25, %cst_9 {dimension_numbers = #tpu.dot_dimension_numbers<[1], [1], [0], [0], [0, 0, 1, 0], [], []>} : vector<128x8xf32>, vector<64x8xf32>, vector<128x64xf32> -> vector<128x64xf32>
    %c0_10 = arith.constant 0 : index
    %c0_11 = arith.constant 0 : index
    %c0_12 = arith.constant 0 : index
    %28 = vector.load %arg6[%c0_10, %c0_11, %c0_12] : memref<1x128x64xf32, #tpu.memory_space<vmem>>, vector<1x128x64xf32>
    %29 = vector.shape_cast %28 : vector<1x128x64xf32> to vector<128x64xf32>
    %30 = vector.shape_cast %27 : vector<128x64xf32> to vector<1x128x64xf32>
    tpu.vector_store %arg6[%c0_10, %c0_11, %c0_12], %30 {strides = array<i32>} : memref<1x128x64xf32, #tpu.memory_space<vmem>>, vector<1x128x64xf32>,
    return
  }
  func.func @transform_0(%arg0: i32, %arg1: i32) -> (i32, i32, i32) {
    %c0_i32 = arith.constant 0 : i32
    %c0_i32_0 = arith.constant 0 : i32
    return %arg0, %c0_i32, %arg1 : i32, i32, i32
  }
  func.func @transform_1(%arg0: i32, %arg1: i32) -> (i32, i32) {
    %c0_i32 = arith.constant 0 : i32
    %c0_i32_0 = arith.constant 0 : i32
    %c0_i32_1 = arith.constant 0 : i32
    return %c0_i32, %c0_i32_0 : i32, i32
  }
  func.func @transform_2(%arg0: i32, %arg1: i32) -> (i32, i32) {
    %c0_i32 = arith.constant 0 : i32
    %c0_i32_0 = arith.constant 0 : i32
    %c0_i32_1 = arith.constant 0 : i32
    return %c0_i32, %c0_i32_0 : i32, i32
  }
  func.func @transform_3(%arg0: i32, %arg1: i32) -> (i32, i32) {
    %c0_i32 = arith.constant 0 : i32
    %c0_i32_0 = arith.constant 0 : i32
    %c0_i32_1 = arith.constant 0 : i32
    return %c0_i32, %c0_i32_0 : i32, i32
  }
  func.func @transform_4(%arg0: i32, %arg1: i32) -> (i32, i32, i32) {
    %c0_i32 = arith.constant 0 : i32
    %c0_i32_0 = arith.constant 0 : i32
    return %arg0, %c0_i32, %arg1 : i32, i32, i32
  }
}

</mosaic_0001>

<llo_original>
// kernel: tpu_custom_call.1
$region0: #{tpu_custom_call.1}
  #allocation0 [shape = 'u32[]', space=smem, size = 0x4, offset = 0x4, fixed_abs, tag = 'smem constant byte address 0x4 - core index']
  #allocation1 [shape = 'u32[72,128]{1,0:T(1,128)}', space=vmem, size = 0x9000, scoped, tag = 'internal scratch']
  %s0 = inlined_call_operand.vmem [shape: f32[2,8,256], index: 0, kind: input, shape index: {}]
  %s1 = inlined_call_operand.vmem [shape: f32[8,1], index: 1, kind: input, shape index: {}]
  %s2 = inlined_call_operand.vmem [shape: f32[8,1], index: 2, kind: input, shape index: {}]
  %s3 = inlined_call_operand.vmem [shape: f32[128,8], index: 3, kind: input, shape index: {}]
  %s4 = inlined_call_operand.vmem [shape: f32[2,128,64], index: 4, kind: output, shape index: {}]
  %s5 = sld [smem:[#allocation0]]
  $region49: #{tpu_custom_call.1} parent=0
    _
  %s7 = ssub.s32 1, %s5
  %s8 = scalar_select 0, %s7, %s5
  loop: start=0, step=1, limit=4
  $region2: #{tpu_custom_call.1} parent=0 // loop_pre_header
    _
  $region3: #{tpu_custom_call.1} parent=0 // loop_header
    %s10 = sphi 0, %s14
    %p11 = scmp.ge.s32.totalorder %s10, 4
    %s17 = sphi 0, %s29
    %s18 = sphi 0, %s25
    %s19 = sphi 0, %s17
    %s20 = sphi 0, %s18
    %s21 = sphi 0, %s19
    %s22 = sphi 0, %s20
    %s34 = sphi 0, %s36
    %s37 = sphi 0, %s34
    %s38 = sphi 0, %s37
    %s54 = sphi 0, %s38
    %s58 = sphi 0, %s58
    %s60 = sphi 0, %s58
    %s61 = sphi 0, %s60
    %s75 = sphi 0, %s61
    %s79 = sphi 0, %s79
    %s81 = sphi 0, %s79
    %s82 = sphi 0, %s81
    %s96 = sphi 0, %s82
    %s100 = sphi 0, %s100
    %s102 = sphi 0, %s100
    %s103 = sphi 0, %s102
    %s117 = sphi 0, %s103
    %s125 = sphi 0, %s127
    %s128 = sphi 0, %s125
    %s129 = sphi 0, %s128
    %s145 = sphi 0, %s129
  $region4: #{tpu_custom_call.1} parent=0 // loop_header_branch
    %13 = sbr.rel (%p11) target = $region8
  $region5: #{tpu_custom_call.1} parent=0 // loop_body
    %s15 = ssub.s32 %s10, 1
    %s16 = ssub.s32 %s10, 2
    %s23 = sadd.s32 1, %s18
    %p24 = scmp.ge.s32.totalorder %s23, 1
    %s25 = scalar_select %p24, 0, %s23
    %s26 = sadd.s32 1, %s17
    %s27 = scalar_select %p24, %s26, %s17
    %p28 = scmp.ge.s32.totalorder %s27, 2
    %s29 = scalar_select %p28, 0, %s27
    %s30 = ssub.s32 %s17, %s29
    %s31 = ssub.s32 %s18, %s25
    %s32 = sor.u32 %s30, %s31
    %p33 = scmp.eq.s32.totalorder %s32, 0
    %s35 = sadd.s32 %s34, 1
    %s36 = scalar_select %p33, %s34, %s35
    %p39 = pneg %p33
    %p40 = scmp.eq.s32.totalorder %s10, 1
    %p41 = por %p39, %p40
    %p42 = scmp.ne.s32.totalorder %s34, %s37
    %p43 = scmp.eq.s32.totalorder %s10, 0
    %p44 = por %p42, %p43
    %p45 = scmp.ne.s32.totalorder %s34, %s37
    %p46 = scmp.eq.s32.totalorder %s15, 1
    %p47 = por %p45, %p46
    %p48 = scmp.ne.s32.totalorder %s37, %s38
    %p49 = scmp.eq.s32.totalorder %s15, 0
    %p50 = por %p48, %p49
    %p51 = scmp.ne.s32.totalorder %s37, %s38
    %p52 = scmp.eq.s32.totalorder %s16, 1
    %p53 = por %p51, %p52
    %p55 = scmp.ne.s32.totalorder %s38, %s54
    %p56 = scmp.eq.s32.totalorder %s16, 0
    %p57 = por %p55, %p56
    %s59 = sadd.s32 %s58, 1
    %p62 = scmp.eq.s32.totalorder %s10, 1
    %p63 = scmp.ne.s32.totalorder %s58, %s60
    %p64 = scmp.eq.s32.totalorder %s10, 0
    %p65 = por %p63, %p64
    %p66 = scmp.ne.s32.totalorder %s58, %s60
    %p67 = scmp.eq.s32.totalorder %s15, 1
    %p68 = por %p66, %p67
    %p69 = scmp.ne.s32.totalorder %s60, %s61
    %p70 = scmp.eq.s32.totalorder %s15, 0
    %p71 = por %p69, %p70
    %p72 = scmp.ne.s32.totalorder %s60, %s61
    %p73 = scmp.eq.s32.totalorder %s16, 1
    %p74 = por %p72, %p73
    %p76 = scmp.ne.s32.totalorder %s61, %s75
    %p77 = scmp.eq.s32.totalorder %s16, 0
    %p78 = por %p76, %p77
    %s80 = sadd.s32 %s79, 1
    %p83 = scmp.eq.s32.totalorder %s10, 1
    %p84 = scmp.ne.s32.totalorder %s79, %s81
    %p85 = scmp.eq.s32.totalorder %s10, 0
    %p86 = por %p84, %p85
    %p87 = scmp.ne.s32.totalorder %s79, %s81
    %p88 = scmp.eq.s32.totalorder %s15, 1
    %p89 = por %p87, %p88
    %p90 = scmp.ne.s32.totalorder %s81, %s82
    %p91 = scmp.eq.s32.totalorder %s15, 0
    %p92 = por %p90, %p91
    %p93 = scmp.ne.s32.totalorder %s81, %s82
    %p94 = scmp.eq.s32.totalorder %s16, 1
    %p95 = por %p93, %p94
    %p97 = scmp.ne.s32.totalorder %s82, %s96
    %p98 = scmp.eq.s32.totalorder %s16, 0
    %p99 = por %p97, %p98
    %s101 = sadd.s32 %s100, 1
    %p104 = scmp.eq.s32.totalorder %s10, 1
    %p105 = scmp.ne.s32.totalorder %s100, %s102
    %p106 = scmp.eq.s32.totalorder %s10, 0
    %p107 = por %p105, %p106
    %p108 = scmp.ne.s32.totalorder %s100, %s102
    %p109 = scmp.eq.s32.totalorder %s15, 1
    %p110 = por %p108, %p109
    %p111 = scmp.ne.s32.totalorder %s102, %s103
    %p112 = scmp.eq.s32.totalorder %s15, 0
    %p113 = por %p111, %p112
    %p114 = scmp.ne.s32.totalorder %s102, %s103
    %p115 = scmp.eq.s32.totalorder %s16, 1
    %p116 = por %p114, %p115
    %p118 = scmp.ne.s32.totalorder %s103, %s117
    %p119 = scmp.eq.s32.totalorder %s16, 0
    %p120 = por %p118, %p119
    %s121 = ssub.s32 %s17, %s29
    %s122 = ssub.s32 %s18, %s25
    %s123 = sor.u32 %s121, %s122
    %p124 = scmp.eq.s32.totalorder %s123, 0
    %s126 = sadd.s32 %s125, 1
    %s127 = scalar_select %p124, %s125, %s126
    %p130 = pneg %p124
    %p131 = scmp.eq.s32.totalorder %s10, 1
    %p132 = por %p130, %p131
    %p133 = scmp.ne.s32.totalorder %s125, %s128
    %p134 = scmp.eq.s32.totalorder %s10, 0
    %p135 = por %p133, %p134
    %p136 = scmp.ne.s32.totalorder %s125, %s128
    %p137 = scmp.eq.s32.totalorder %s15, 1
    %p138 = por %p136, %p137
    %p139 = scmp.ne.s32.totalorder %s128, %s129
    %p140 = scmp.eq.s32.totalorder %s15, 0
    %p141 = por %p139, %p140
    %p142 = scmp.ne.s32.totalorder %s128, %s129
    %p143 = scmp.eq.s32.totalorder %s16, 1
    %p144 = por %p142, %p143
    %p146 = scmp.ne.s32.totalorder %s129, %s145
    %p147 = scmp.eq.s32.totalorder %s16, 0
    %p148 = por %p146, %p147
    %p149 = scmp.le.s32.totalorder 1, %s10
    %p150 = scmp.lt.s32.totalorder %s10, 3
    %p151 = pnand %p149, %p150
    %p152 = pneg %p151
    // Predicated region
    $region9: #{tpu_custom_call.1} parent=5 // pred_check
      _
    $region10: #{tpu_custom_call.1} parent=5 // pred_check_branch
      %154 = sbr.rel (%p151) target = $region12
    $region11: #{tpu_custom_call.1} parent=5 // pred_region
      %s155 = ssub.s32 %s10, 1
      // Predicated region
      $region13: #{tpu_custom_call.1} parent=11 // pred_check
        %p156 = pneg %p71
      $region14: #{tpu_custom_call.1} parent=11 // pred_check_branch
        %158 = sbr.rel (%p156) target = $region16
      $region15: #{tpu_custom_call.1} parent=11 // pred_region
        _
      $region16: #{tpu_custom_call.1} parent=11 // pred_fallthru
        _
      // Predicated region
      $region17: #{tpu_custom_call.1} parent=11 // pred_check
        %p159 = pneg %p92
      $region18: #{tpu_custom_call.1} parent=11 // pred_check_branch
        %161 = sbr.rel (%p159) target = $region20
      $region19: #{tpu_custom_call.1} parent=11 // pred_region
        _
      $region20: #{tpu_custom_call.1} parent=11 // pred_fallthru
        _
      // Predicated region
      $region21: #{tpu_custom_call.1} parent=11 // pred_check
        %p162 = pneg %p113
      $region22: #{tpu_custom_call.1} parent=11 // pred_check_branch
        %164 = sbr.rel (%p162) target = $region24
      $region23: #{tpu_custom_call.1} parent=11 // pred_region
        _
      $region24: #{tpu_custom_call.1} parent=11 // pred_fallthru
        _
    $region12: #{tpu_custom_call.1} parent=5 // pred_fallthru
      _
    %p165 = scmp.lt.s32.totalorder %s10, 2
    // Predicated region
    $region25: #{tpu_custom_call.1} parent=5 // pred_check
      %p166 = pneg %p165
    $region26: #{tpu_custom_call.1} parent=5 // pred_check_branch
      %168 = sbr.rel (%p166) target = $region28
    $region27: #{tpu_custom_call.1} parent=5 // pred_region
      // Predicated region
      $region29: #{tpu_custom_call.1} parent=27 // pred_check
        %p169 = pneg %p44
      $region30: #{tpu_custom_call.1} parent=27 // pred_check_branch
        %171 = sbr.rel (%p169) target = $region32
      $region31: #{tpu_custom_call.1} parent=27 // pred_region
        %s172 = smul.u32 2, %s18
        %p173 = scmp.lt.s32.totalorder %s17, 1
        %s174 = scalar_select %p173, %s17, 1
        %p175 = scmp.lt.s32.totalorder %s172, 1
        %s176 = scalar_select %p175, %s172, 1
        %s177 = smul.addr %s174, 2
        %s178 = sadd.s32 %s176, %s177
        %s179 = smul.addr %s178, 8
        %s180 = scalar_lea.vmem %s0, %s179
        %s181 = smul.u32 2, %s18
      $region32: #{tpu_custom_call.1} parent=27 // pred_fallthru
        _
    $region28: #{tpu_custom_call.1} parent=5 // pred_fallthru
      _
    %p182 = scmp.le.s32.totalorder 1, %s10
    %p183 = scmp.lt.s32.totalorder %s10, 3
    %p184 = pnand %p182, %p183
    %p185 = pneg %p184
    // Predicated region
    $region33: #{tpu_custom_call.1} parent=5 // pred_check
      _
    $region34: #{tpu_custom_call.1} parent=5 // pred_check_branch
      %187 = sbr.rel (%p184) target = $region36
    $region35: #{tpu_custom_call.1} parent=5 // pred_region
      %s188 = ssub.s32 %s10, 1
      %s189 = smul.u32 2, %s20
      %p190 = scmp.lt.s32.totalorder %s19, 1
      %s191 = scalar_select %p190, %s19, 1
      %p192 = scmp.lt.s32.totalorder %s189, 1
      %s193 = scalar_select %p192, %s189, 1
      %s194 = smul.addr %s191, 2
      %s195 = sadd.s32 %s193, %s194
      %s196 = smul.addr %s195, 8
      %s197 = scalar_lea.vmem %s0, %s196
      %p198 = pneg %p50
      %p199 = pneg %p47
      %p200 = pneg %p71
      %p201 = pneg %p68
      %p202 = pneg %p92
      %p203 = pneg %p89
      %p204 = pneg %p113
      %p205 = pneg %p110
      %p206 = pneg %p141
      %p207 = pneg %p138
      %p208 = scmp.lt.s32.totalorder %s19, 1
      %s209 = scalar_select %p208, %s19, 1
      %p210 = scmp.lt.s32.totalorder %s20, 0
      %s211 = scalar_select %p210, %s20, 0
      %s212 = smul.addr %s209, 16
      %s213 = sadd.s32 %s211, %s212
      %s214 = smul.addr %s213, 8
      %s215 = scalar_lea.vmem %s4, %s214
      %s216 = smul.u32 2, %s20
      %p217 = scmp.lt.s32.totalorder %s19, 1
      %s218 = scalar_select %p217, %s19, 1
      %p219 = scmp.lt.s32.totalorder %s216, 1
      %s220 = scalar_select %p219, %s216, 1
      %s221 = smul.addr %s218, 2
      %s222 = sadd.s32 %s220, %s221
      %s223 = smul.addr %s222, 8
      %s224 = scalar_lea.vmem %s0, %s223
      %s225 = smul.u32 2, %s20
      %p226 = scmp.lt.s32.totalorder %s19, 1
      %s227 = scalar_select %p226, %s19, 1
      %p228 = scmp.lt.s32.totalorder %s20, 0
      %s229 = scalar_select %p228, %s20, 0
      %s230 = smul.addr %s227, 16
      %s231 = sadd.s32 %s229, %s230
      %s232 = smul.addr %s231, 8
      %s233 = scalar_lea.vmem %s4, %s232
      %v234 = vld [vmem:[%s224] sm:$0xff]
      %v235 = vld [vmem:[%s224 + $0x8] sm:$0xff]
      %v236 = vld [vmem:[%s1] sm:$0xff]
      %238 = vset.pattern.permute.xlu0 0
      %239 = vperm.xlu0 %238, %v236
      %v240 = vpop.permute.xlu0 %239
      %v242 = vmul.f32 %v234, %v240
      %v243 = vmul.f32 %v235, %v240
      %v244 = vld [vmem:[%s2] sm:$0xff]
      %246 = vset.pattern.permute.xlu0 0
      %247 = vperm.xlu0 %246, %v244
      %v248 = vpop.permute.xlu0 %247
      %v250 = vadd.f32 %v242, %v248
      %v251 = vadd.f32 %v243, %v248
      %v252 = vmax.f32 %v250, 0.0
      %v253 = vmax.f32 %v251, 0.0
      %254 = vxpose.xlu0.b32.start [1/16] %v252, 128
      %255 = vxpose.xlu0.b32.cont [2/16] 0.0, 128
      %256 = vxpose.xlu0.b32.cont [3/16] 0.0, 128
      %257 = vxpose.xlu0.b32.cont [4/16] 0.0, 128
      %258 = vxpose.xlu0.b32.cont [5/16] 0.0, 128
      %259 = vxpose.xlu0.b32.cont [6/16] 0.0, 128
      %260 = vxpose.xlu0.b32.cont [7/16] 0.0, 128
      %261 = vxpose.xlu0.b32.cont [8/16] 0.0, 128
      %262 = vxpose.xlu0.b32.cont [9/16] 0.0, 128
      %263 = vxpose.xlu0.b32.cont [10/16] 0.0, 128
      %264 = vxpose.xlu0.b32.cont [11/16] 0.0, 128
      %265 = vxpose.xlu0.b32.cont [12/16] 0.0, 128
      %266 = vxpose.xlu0.b32.cont [13/16] 0.0, 128
      %267 = vxpose.xlu0.b32.cont [14/16] 0.0, 128
      %268 = vxpose.xlu0.b32.cont [15/16] 0.0, 128
      %269 = vxpose.xlu0.b32.end [16/16] 0.0, 128
      %v270 = vpop.trf.xlu0
      %v271 = vpop.trf.xlu0
      %v272 = vpop.trf.xlu0
      %v273 = vpop.trf.xlu0
      %v274 = vpop.trf.xlu0
      %v275 = vpop.trf.xlu0
      %v276 = vpop.trf.xlu0
      %v277 = vpop.trf.xlu0
      %v278 = vpop.trf.xlu0
      %v279 = vpop.trf.xlu0
      %v280 = vpop.trf.xlu0
      %v281 = vpop.trf.xlu0
      %v282 = vpop.trf.xlu0
      %v283 = vpop.trf.xlu0
      %v284 = vpop.trf.xlu0
      %v285 = vpop.trf.xlu0
      %286 = vxpose.xlu0.b32.start [1/16] %v253, 128
      %287 = vxpose.xlu0.b32.cont [2/16] 0.0, 128
      %288 = vxpose.xlu0.b32.cont [3/16] 0.0, 128
      %289 = vxpose.xlu0.b32.cont [4/16] 0.0, 128
      %290 = vxpose.xlu0.b32.cont [5/16] 0.0, 128
      %291 = vxpose.xlu0.b32.cont [6/16] 0.0, 128
      %292 = vxpose.xlu0.b32.cont [7/16] 0.0, 128
      %293 = vxpose.xlu0.b32.cont [8/16] 0.0, 128
      %294 = vxpose.xlu0.b32.cont [9/16] 0.0, 128
      %295 = vxpose.xlu0.b32.cont [10/16] 0.0, 128
      %296 = vxpose.xlu0.b32.cont [11/16] 0.0, 128
      %297 = vxpose.xlu0.b32.cont [12/16] 0.0, 128
      %298 = vxpose.xlu0.b32.cont [13/16] 0.0, 128
      %299 = vxpose.xlu0.b32.cont [14/16] 0.0, 128
      %300 = vxpose.xlu0.b32.cont [15/16] 0.0, 128
      %301 = vxpose.xlu0.b32.end [16/16] 0.0, 128
      %v302 = vpop.trf.xlu0
      %v303 = vpop.trf.xlu0
      %v304 = vpop.trf.xlu0
      %v305 = vpop.trf.xlu0
      %v306 = vpop.trf.xlu0
      %v307 = vpop.trf.xlu0
      %v308 = vpop.trf.xlu0
      %v309 = vpop.trf.xlu0
      %v310 = vpop.trf.xlu0
      %v311 = vpop.trf.xlu0
      %v312 = vpop.trf.xlu0
      %v313 = vpop.trf.xlu0
      %v314 = vpop.trf.xlu0
      %v315 = vpop.trf.xlu0
      %v316 = vpop.trf.xlu0
      %v317 = vpop.trf.xlu0
      %v350 = vrot.slane %v270, 2
      %v351 = vrot.slane %v270, 4
      %v352 = vrot.slane %v270, 6
      %v353 = vrot.slane %v271, 2
      %v354 = vrot.slane %v271, 4
      %v355 = vrot.slane %v271, 6
      %v356 = vrot.slane %v272, 2
      %v357 = vrot.slane %v272, 4
      %v358 = vrot.slane %v272, 6
      %v359 = vrot.slane %v273, 2
      %v360 = vrot.slane %v273, 4
      %v361 = vrot.slane %v273, 6
      %v362 = vrot.slane %v274, 2
      %v363 = vrot.slane %v274, 4
      %v364 = vrot.slane %v274, 6
      %v365 = vrot.slane %v275, 2
      %v366 = vrot.slane %v275, 4
      %v367 = vrot.slane %v275, 6
      %v368 = vrot.slane %v276, 2
      %v369 = vrot.slane %v276, 4
      %v370 = vrot.slane %v276, 6
      %v371 = vrot.slane %v277, 2
      %v372 = vrot.slane %v277, 4
      %v373 = vrot.slane %v277, 6
      %v374 = vrot.slane %v278, 2
      %v375 = vrot.slane %v278, 4
      %v376 = vrot.slane %v278, 6
      %v377 = vrot.slane %v279, 2
      %v378 = vrot.slane %v279, 4
      %v379 = vrot.slane %v279, 6
      %v380 = vrot.slane %v280, 2
      %v381 = vrot.slane %v280, 4
      %v382 = vrot.slane %v280, 6
      %v383 = vrot.slane %v281, 2
      %v384 = vrot.slane %v281, 4
      %v385 = vrot.slane %v281, 6
      %v386 = vrot.slane %v282, 2
      %v387 = vrot.slane %v282, 4
      %v388 = vrot.slane %v282, 6
      %v389 = vrot.slane %v283, 2
      %v390 = vrot.slane %v283, 4
      %v391 = vrot.slane %v283, 6
      %v392 = vrot.slane %v284, 2
      %v393 = vrot.slane %v284, 4
      %v394 = vrot.slane %v284, 6
      %v395 = vrot.slane %v285, 2
      %v396 = vrot.slane %v285, 4
      %v397 = vrot.slane %v285, 6
      %v398 = vrot.slane %v302, 2
      %v399 = vrot.slane %v302, 4
      %v400 = vrot.slane %v302, 6
      %v401 = vrot.slane %v303, 2
      %v402 = vrot.slane %v303, 4
      %v403 = vrot.slane %v303, 6
      %v404 = vrot.slane %v304, 2
      %v405 = vrot.slane %v304, 4
      %v406 = vrot.slane %v304, 6
      %v407 = vrot.slane %v305, 2
      %v408 = vrot.slane %v305, 4
      %v409 = vrot.slane %v305, 6
      %v410 = vrot.slane %v306, 2
      %v411 = vrot.slane %v306, 4
      %v412 = vrot.slane %v306, 6
      %v413 = vrot.slane %v307, 2
      %v414 = vrot.slane %v307, 4
      %v415 = vrot.slane %v307, 6
      %v416 = vrot.slane %v308, 2
      %v417 = vrot.slane %v308, 4
      %v418 = vrot.slane %v308, 6
      %v419 = vrot.slane %v309, 2
      %v420 = vrot.slane %v309, 4
      %v421 = vrot.slane %v309, 6
      %v422 = vrot.slane %v310, 2
      %v423 = vrot.slane %v310, 4
      %v424 = vrot.slane %v310, 6
      %v425 = vrot.slane %v311, 2
      %v426 = vrot.slane %v311, 4
      %v427 = vrot.slane %v311, 6
      %v428 = vrot.slane %v312, 2
      %v429 = vrot.slane %v312, 4
      %v430 = vrot.slane %v312, 6
      %v431 = vrot.slane %v313, 2
      %v432 = vrot.slane %v313, 4
      %v433 = vrot.slane %v313, 6
      %v434 = vrot.slane %v314, 2
      %v435 = vrot.slane %v314, 4
      %v436 = vrot.slane %v314, 6
      %v437 = vrot.slane %v315, 2
      %v438 = vrot.slane %v315, 4
      %v439 = vrot.slane %v315, 6
      %v440 = vrot.slane %v316, 2
      %v441 = vrot.slane %v316, 4
      %v442 = vrot.slane %v316, 6
      %v443 = vrot.slane %v317, 2
      %v444 = vrot.slane %v317, 4
      %v445 = vrot.slane %v317, 6
      %v542 = vrot.slane %v270, 7
      %v543 = vrot.slane %v542, 2
      %v544 = vrot.slane %v350, 7
      %v545 = vrot.slane %v544, 2
      %v546 = vrot.slane %v351, 7
      %v547 = vrot.slane %v546, 2
      %v548 = vrot.slane %v352, 7
      %v549 = vrot.slane %v548, 2
      %v550 = vrot.slane %v271, 7
      %v551 = vrot.slane %v550, 2
      %v552 = vrot.slane %v353, 7
      %v553 = vrot.slane %v552, 2
      %v554 = vrot.slane %v354, 7
      %v555 = vrot.slane %v554, 2
      %v556 = vrot.slane %v355, 7
      %v557 = vrot.slane %v556, 2
      %v558 = vrot.slane %v272, 7
      %v559 = vrot.slane %v558, 2
      %v560 = vrot.slane %v356, 7
      %v561 = vrot.slane %v560, 2
      %v562 = vrot.slane %v357, 7
      %v563 = vrot.slane %v562, 2
      %v564 = vrot.slane %v358, 7
      %v565 = vrot.slane %v564, 2
      %v566 = vrot.slane %v273, 7
      %v567 = vrot.slane %v566, 2
      %v568 = vrot.slane %v359, 7
      %v569 = vrot.slane %v568, 2
      %v570 = vrot.slane %v360, 7
      %v571 = vrot.slane %v570, 2
      %v572 = vrot.slane %v361, 7
      %v573 = vrot.slane %v572, 2
      %v574 = vrot.slane %v274, 7
      %v575 = vrot.slane %v574, 2
      %v576 = vrot.slane %v362, 7
      %v577 = vrot.slane %v576, 2
      %v578 = vrot.slane %v363, 7
      %v579 = vrot.slane %v578, 2
      %v580 = vrot.slane %v364, 7
      %v581 = vrot.slane %v580, 2
      %v582 = vrot.slane %v275, 7
      %v583 = vrot.slane %v582, 2
      %v584 = vrot.slane %v365, 7
      %v585 = vrot.slane %v584, 2
      %v586 = vrot.slane %v366, 7
      %v587 = vrot.slane %v586, 2
      %v588 = vrot.slane %v367, 7
      %v589 = vrot.slane %v588, 2
      %v590 = vrot.slane %v276, 7
      %v591 = vrot.slane %v590, 2
      %v592 = vrot.slane %v368, 7
      %v593 = vrot.slane %v592, 2
      %v594 = vrot.slane %v369, 7
      %v595 = vrot.slane %v594, 2
      %v596 = vrot.slane %v370, 7
      %v597 = vrot.slane %v596, 2
      %v598 = vrot.slane %v277, 7
      %v599 = vrot.slane %v598, 2
      %v600 = vrot.slane %v371, 7
      %v601 = vrot.slane %v600, 2
      %v602 = vrot.slane %v372, 7
      %v603 = vrot.slane %v602, 2
      %v604 = vrot.slane %v373, 7
      %v605 = vrot.slane %v604, 2
      %v606 = vrot.slane %v278, 7
      %v607 = vrot.slane %v606, 2
      %v608 = vrot.slane %v374, 7
      %v609 = vrot.slane %v608, 2
      %v610 = vrot.slane %v375, 7
      %v611 = vrot.slane %v610, 2
      %v612 = vrot.slane %v376, 7
      %v613 = vrot.slane %v612, 2
      %v614 = vrot.slane %v279, 7
      %v615 = vrot.slane %v614, 2
      %v616 = vrot.slane %v377, 7
      %v617 = vrot.slane %v616, 2
      %v618 = vrot.slane %v378, 7
      %v619 = vrot.slane %v618, 2
      %v620 = vrot.slane %v379, 7
      %v621 = vrot.slane %v620, 2
      %v622 = vrot.slane %v280, 7
      %v623 = vrot.slane %v622, 2
      %v624 = vrot.slane %v380, 7
      %v625 = vrot.slane %v624, 2
      %v626 = vrot.slane %v381, 7
      %v627 = vrot.slane %v626, 2
      %v628 = vrot.slane %v382, 7
      %v629 = vrot.slane %v628, 2
      %v630 = vrot.slane %v281, 7
      %v631 = vrot.slane %v630, 2
      %v632 = vrot.slane %v383, 7
      %v633 = vrot.slane %v632, 2
      %v634 = vrot.slane %v384, 7
      %v635 = vrot.slane %v634, 2
      %v636 = vrot.slane %v385, 7
      %v637 = vrot.slane %v636, 2
      %v638 = vrot.slane %v282, 7
      %v639 = vrot.slane %v638, 2
      %v640 = vrot.slane %v386, 7
      %v641 = vrot.slane %v640, 2
      %v642 = vrot.slane %v387, 7
      %v643 = vrot.slane %v642, 2
      %v644 = vrot.slane %v388, 7
      %v645 = vrot.slane %v644, 2
      %v646 = vrot.slane %v283, 7
      %v647 = vrot.slane %v646, 2
      %v648 = vrot.slane %v389, 7
      %v649 = vrot.slane %v648, 2
      %v650 = vrot.slane %v390, 7
      %v651 = vrot.slane %v650, 2
      %v652 = vrot.slane %v391, 7
      %v653 = vrot.slane %v652, 2
      %v654 = vrot.slane %v284, 7
      %v655 = vrot.slane %v654, 2
      %v656 = vrot.slane %v392, 7
      %v657 = vrot.slane %v656, 2
      %v658 = vrot.slane %v393, 7
      %v659 = vrot.slane %v658, 2
      %v660 = vrot.slane %v394, 7
      %v661 = vrot.slane %v660, 2
      %v662 = vrot.slane %v285, 7
      %v663 = vrot.slane %v662, 2
      %v664 = vrot.slane %v395, 7
      %v665 = vrot.slane %v664, 2
      %v666 = vrot.slane %v396, 7
      %v667 = vrot.slane %v666, 2
      %v668 = vrot.slane %v397, 7
      %v669 = vrot.slane %v668, 2
      %v670 = vrot.slane %v302, 7
      %v671 = vrot.slane %v670, 2
      %v672 = vrot.slane %v398, 7
      %v673 = vrot.slane %v672, 2
      %v674 = vrot.slane %v399, 7
      %v675 = vrot.slane %v674, 2
      %v676 = vrot.slane %v400, 7
      %v677 = vrot.slane %v676, 2
      %v678 = vrot.slane %v303, 7
      %v679 = vrot.slane %v678, 2
      %v680 = vrot.slane %v401, 7
      %v681 = vrot.slane %v680, 2
      %v682 = vrot.slane %v402, 7
      %v683 = vrot.slane %v682, 2
      %v684 = vrot.slane %v403, 7
      %v685 = vrot.slane %v684, 2
      %v686 = vrot.slane %v304, 7
      %v687 = vrot.slane %v686, 2
      %v688 = vrot.slane %v404, 7
      %v689 = vrot.slane %v688, 2
      %v690 = vrot.slane %v405, 7
      %v691 = vrot.slane %v690, 2
      %v692 = vrot.slane %v406, 7
      %v693 = vrot.slane %v692, 2
      %v694 = vrot.slane %v305, 7
      %v695 = vrot.slane %v694, 2
      %v696 = vrot.slane %v407, 7
      %v697 = vrot.slane %v696, 2
      %v698 = vrot.slane %v408, 7
      %v699 = vrot.slane %v698, 2
      %v700 = vrot.slane %v409, 7
      %v701 = vrot.slane %v700, 2
      %v702 = vrot.slane %v306, 7
      %v703 = vrot.slane %v702, 2
      %v704 = vrot.slane %v410, 7
      %v705 = vrot.slane %v704, 2
      %v706 = vrot.slane %v411, 7
      %v707 = vrot.slane %v706, 2
      %v708 = vrot.slane %v412, 7
      %v709 = vrot.slane %v708, 2
      %v710 = vrot.slane %v307, 7
      %v711 = vrot.slane %v710, 2
      %v712 = vrot.slane %v413, 7
      %v713 = vrot.slane %v712, 2
      %v714 = vrot.slane %v414, 7
      %v715 = vrot.slane %v714, 2
      %v716 = vrot.slane %v415, 7
      %v717 = vrot.slane %v716, 2
      %v718 = vrot.slane %v308, 7
      %v719 = vrot.slane %v718, 2
      %v720 = vrot.slane %v416, 7
      %v721 = vrot.slane %v720, 2
      %v722 = vrot.slane %v417, 7
      %v723 = vrot.slane %v722, 2
      %v724 = vrot.slane %v418, 7
      %v725 = vrot.slane %v724, 2
      %v726 = vrot.slane %v309, 7
      %v727 = vrot.slane %v726, 2
      %v728 = vrot.slane %v419, 7
      %v729 = vrot.slane %v728, 2
      %v730 = vrot.slane %v420, 7
      %v731 = vrot.slane %v730, 2
      %v732 = vrot.slane %v421, 7
      %v733 = vrot.slane %v732, 2
      %v734 = vrot.slane %v310, 7
      %v735 = vrot.slane %v734, 2
      %v736 = vrot.slane %v422, 7
      %v737 = vrot.slane %v736, 2
      %v738 = vrot.slane %v423, 7
      %v739 = vrot.slane %v738, 2
      %v740 = vrot.slane %v424, 7
      %v741 = vrot.slane %v740, 2
      %v742 = vrot.slane %v311, 7
      %v743 = vrot.slane %v742, 2
      %v744 = vrot.slane %v425, 7
      %v745 = vrot.slane %v744, 2
      %v746 = vrot.slane %v426, 7
      %v747 = vrot.slane %v746, 2
      %v748 = vrot.slane %v427, 7
      %v749 = vrot.slane %v748, 2
      %v750 = vrot.slane %v312, 7
      %v751 = vrot.slane %v750, 2
      %v752 = vrot.slane %v428, 7
      %v753 = vrot.slane %v752, 2
      %v754 = vrot.slane %v429, 7
      %v755 = vrot.slane %v754, 2
      %v756 = vrot.slane %v430, 7
      %v757 = vrot.slane %v756, 2
      %v758 = vrot.slane %v313, 7
      %v759 = vrot.slane %v758, 2
      %v760 = vrot.slane %v431, 7
      %v761 = vrot.slane %v760, 2
      %v762 = vrot.slane %v432, 7
      %v763 = vrot.slane %v762, 2
      %v764 = vrot.slane %v433, 7
      %v765 = vrot.slane %v764, 2
      %v766 = vrot.slane %v314, 7
      %v767 = vrot.slane %v766, 2
      %v768 = vrot.slane %v434, 7
      %v769 = vrot.slane %v768, 2
      %v770 = vrot.slane %v435, 7
      %v771 = vrot.slane %v770, 2
      %v772 = vrot.slane %v436, 7
      %v773 = vrot.slane %v772, 2
      %v774 = vrot.slane %v315, 7
      %v775 = vrot.slane %v774, 2
      %v776 = vrot.slane %v437, 7
      %v777 = vrot.slane %v776, 2
      %v778 = vrot.slane %v438, 7
      %v779 = vrot.slane %v778, 2
      %v780 = vrot.slane %v439, 7
      %v781 = vrot.slane %v780, 2
      %v782 = vrot.slane %v316, 7
      %v783 = vrot.slane %v782, 2
      %v784 = vrot.slane %v440, 7
      %v785 = vrot.slane %v784, 2
      %v786 = vrot.slane %v441, 7
      %v787 = vrot.slane %v786, 2
      %v788 = vrot.slane %v442, 7
      %v789 = vrot.slane %v788, 2
      %v790 = vrot.slane %v317, 7
      %v791 = vrot.slane %v790, 2
      %v792 = vrot.slane %v443, 7
      %v793 = vrot.slane %v792, 2
      %v794 = vrot.slane %v444, 7
      %v795 = vrot.slane %v794, 2
      %v796 = vrot.slane %v445, 7
      %v797 = vrot.slane %v796, 2
      %v926 = vadd.f32 %v270, %v543
      %v927 = vadd.f32 %v350, %v545
      %v928 = vadd.f32 %v351, %v547
      %v929 = vadd.f32 %v352, %v549
      %v930 = vadd.f32 %v271, %v551
      %v931 = vadd.f32 %v353, %v553
      %v932 = vadd.f32 %v354, %v555
      %v933 = vadd.f32 %v355, %v557
      %v934 = vadd.f32 %v272, %v559
      %v935 = vadd.f32 %v356, %v561
      %v936 = vadd.f32 %v357, %v563
      %v937 = vadd.f32 %v358, %v565
      %v938 = vadd.f32 %v273, %v567
      %v939 = vadd.f32 %v359, %v569
      %v940 = vadd.f32 %v360, %v571
      %v941 = vadd.f32 %v361, %v573
      %v942 = vadd.f32 %v274, %v575
      %v943 = vadd.f32 %v362, %v577
      %v944 = vadd.f32 %v363, %v579
      %v945 = vadd.f32 %v364, %v581
      %v946 = vadd.f32 %v275, %v583
      %v947 = vadd.f32 %v365, %v585
      %v948 = vadd.f32 %v366, %v587
      %v949 = vadd.f32 %v367, %v589
      %v950 = vadd.f32 %v276, %v591
      %v951 = vadd.f32 %v368, %v593
      %v952 = vadd.f32 %v369, %v595
      %v953 = vadd.f32 %v370, %v597
      %v954 = vadd.f32 %v277, %v599
      %v955 = vadd.f32 %v371, %v601
      %v956 = vadd.f32 %v372, %v603
      %v957 = vadd.f32 %v373, %v605
      %v958 = vadd.f32 %v278, %v607
      %v959 = vadd.f32 %v374, %v609
      %v960 = vadd.f32 %v375, %v611
      %v961 = vadd.f32 %v376, %v613
      %v962 = vadd.f32 %v279, %v615
      %v963 = vadd.f32 %v377, %v617
      %v964 = vadd.f32 %v378, %v619
      %v965 = vadd.f32 %v379, %v621
      %v966 = vadd.f32 %v280, %v623
      %v967 = vadd.f32 %v380, %v625
      %v968 = vadd.f32 %v381, %v627
      %v969 = vadd.f32 %v382, %v629
      %v970 = vadd.f32 %v281, %v631
      %v971 = vadd.f32 %v383, %v633
      %v972 = vadd.f32 %v384, %v635
      %v973 = vadd.f32 %v385, %v637
      %v974 = vadd.f32 %v282, %v639
      %v975 = vadd.f32 %v386, %v641
      %v976 = vadd.f32 %v387, %v643
      %v977 = vadd.f32 %v388, %v645
      %v978 = vadd.f32 %v283, %v647
      %v979 = vadd.f32 %v389, %v649
      %v980 = vadd.f32 %v390, %v651
      %v981 = vadd.f32 %v391, %v653
      %v982 = vadd.f32 %v284, %v655
      %v983 = vadd.f32 %v392, %v657
      %v984 = vadd.f32 %v393, %v659
      %v985 = vadd.f32 %v394, %v661
      %v986 = vadd.f32 %v285, %v663
      %v987 = vadd.f32 %v395, %v665
      %v988 = vadd.f32 %v396, %v667
      %v989 = vadd.f32 %v397, %v669
      %v990 = vadd.f32 %v302, %v671
      %v991 = vadd.f32 %v398, %v673
      %v992 = vadd.f32 %v399, %v675
      %v993 = vadd.f32 %v400, %v677
      %v994 = vadd.f32 %v303, %v679
      %v995 = vadd.f32 %v401, %v681
      %v996 = vadd.f32 %v402, %v683
      %v997 = vadd.f32 %v403, %v685
      %v998 = vadd.f32 %v304, %v687
      %v999 = vadd.f32 %v404, %v689
      %v1000 = vadd.f32 %v405, %v691
      %v1001 = vadd.f32 %v406, %v693
      %v1002 = vadd.f32 %v305, %v695
      %v1003 = vadd.f32 %v407, %v697
      %v1004 = vadd.f32 %v408, %v699
      %v1005 = vadd.f32 %v409, %v701
      %v1006 = vadd.f32 %v306, %v703
      %v1007 = vadd.f32 %v410, %v705
      %v1008 = vadd.f32 %v411, %v707
      %v1009 = vadd.f32 %v412, %v709
      %v1010 = vadd.f32 %v307, %v711
      %v1011 = vadd.f32 %v413, %v713
      %v1012 = vadd.f32 %v414, %v715
      %v1013 = vadd.f32 %v415, %v717
      %v1014 = vadd.f32 %v308, %v719
      %v1015 = vadd.f32 %v416, %v721
      %v1016 = vadd.f32 %v417, %v723
      %v1017 = vadd.f32 %v418, %v725
      %v1018 = vadd.f32 %v309, %v727
      %v1019 = vadd.f32 %v419, %v729
      %v1020 = vadd.f32 %v420, %v731
      %v1021 = vadd.f32 %v421, %v733
      %v1022 = vadd.f32 %v310, %v735
      %v1023 = vadd.f32 %v422, %v737
      %v1024 = vadd.f32 %v423, %v739
      %v1025 = vadd.f32 %v424, %v741
      %v1026 = vadd.f32 %v311, %v743
      %v1027 = vadd.f32 %v425, %v745
      %v1028 = vadd.f32 %v426, %v747
      %v1029 = vadd.f32 %v427, %v749
      %v1030 = vadd.f32 %v312, %v751
      %v1031 = vadd.f32 %v428, %v753
      %v1032 = vadd.f32 %v429, %v755
      %v1033 = vadd.f32 %v430, %v757
      %v1034 = vadd.f32 %v313, %v759
      %v1035 = vadd.f32 %v431, %v761
      %v1036 = vadd.f32 %v432, %v763
      %v1037 = vadd.f32 %v433, %v765
      %v1038 = vadd.f32 %v314, %v767
      %v1039 = vadd.f32 %v434, %v769
      %v1040 = vadd.f32 %v435, %v771
      %v1041 = vadd.f32 %v436, %v773
      %v1042 = vadd.f32 %v315, %v775
      %v1043 = vadd.f32 %v437, %v777
      %v1044 = vadd.f32 %v438, %v779
      %v1045 = vadd.f32 %v439, %v781
      %v1046 = vadd.f32 %v316, %v783
      %v1047 = vadd.f32 %v440, %v785
      %v1048 = vadd.f32 %v441, %v787
      %v1049 = vadd.f32 %v442, %v789
      %v1050 = vadd.f32 %v317, %v791
      %v1051 = vadd.f32 %v443, %v793
      %v1052 = vadd.f32 %v444, %v795
      %v1053 = vadd.f32 %v445, %v797
      %v1054 = vadd.f32 %v926, %v934
      %v1055 = vadd.f32 %v927, %v935
      %v1056 = vadd.f32 %v928, %v936
      %v1057 = vadd.f32 %v929, %v937
      %v1058 = vadd.f32 %v930, %v938
      %v1059 = vadd.f32 %v931, %v939
      %v1060 = vadd.f32 %v932, %v940
      %v1061 = vadd.f32 %v933, %v941
      %v1062 = vadd.f32 %v942, %v950
      %v1063 = vadd.f32 %v943, %v951
      %v1064 = vadd.f32 %v944, %v952
      %v1065 = vadd.f32 %v945, %v953
      %v1066 = vadd.f32 %v946, %v954
      %v1067 = vadd.f32 %v947, %v955
      %v1068 = vadd.f32 %v948, %v956
      %v1069 = vadd.f32 %v949, %v957
      %v1070 = vadd.f32 %v958, %v966
      %v1071 = vadd.f32 %v959, %v967
      %v1072 = vadd.f32 %v960, %v968
      %v1073 = vadd.f32 %v961, %v969
      %v1074 = vadd.f32 %v962, %v970
      %v1075 = vadd.f32 %v963, %v971
      %v1076 = vadd.f32 %v964, %v972
      %v1077 = vadd.f32 %v965, %v973
      %v1078 = vadd.f32 %v974, %v982
      %v1079 = vadd.f32 %v975, %v983
      %v1080 = vadd.f32 %v976, %v984
      %v1081 = vadd.f32 %v977, %v985
      %v1082 = vadd.f32 %v978, %v986
      %v1083 = vadd.f32 %v979, %v987
      %v1084 = vadd.f32 %v980, %v988
      %v1085 = vadd.f32 %v981, %v989
      %v1086 = vadd.f32 %v990, %v998
      %v1087 = vadd.f32 %v991, %v999
      %v1088 = vadd.f32 %v992, %v1000
      %v1089 = vadd.f32 %v993, %v1001
      %v1090 = vadd.f32 %v994, %v1002
      %v1091 = vadd.f32 %v995, %v1003
      %v1092 = vadd.f32 %v996, %v1004
      %v1093 = vadd.f32 %v997, %v1005
      %v1094 = vadd.f32 %v1006, %v1014
      %v1095 = vadd.f32 %v1007, %v1015
      %v1096 = vadd.f32 %v1008, %v1016
      %v1097 = vadd.f32 %v1009, %v1017
      %v1098 = vadd.f32 %v1010, %v1018
      %v1099 = vadd.f32 %v1011, %v1019
      %v1100 = vadd.f32 %v1012, %v1020
      %v1101 = vadd.f32 %v1013, %v1021
      %v1102 = vadd.f32 %v1022, %v1030
      %v1103 = vadd.f32 %v1023, %v1031
      %v1104 = vadd.f32 %v1024, %v1032
      %v1105 = vadd.f32 %v1025, %v1033
      %v1106 = vadd.f32 %v1026, %v1034
      %v1107 = vadd.f32 %v1027, %v1035
      %v1108 = vadd.f32 %v1028, %v1036
      %v1109 = vadd.f32 %v1029, %v1037
      %v1110 = vadd.f32 %v1038, %v1046
      %v1111 = vadd.f32 %v1039, %v1047
      %v1112 = vadd.f32 %v1040, %v1048
      %v1113 = vadd.f32 %v1041, %v1049
      %v1114 = vadd.f32 %v1042, %v1050
      %v1115 = vadd.f32 %v1043, %v1051
      %v1116 = vadd.f32 %v1044, %v1052
      %v1117 = vadd.f32 %v1045, %v1053
      %v1118 = vmul.f32 %v1054, 0.25
      %v1119 = vmul.f32 %v1055, 0.25
      %v1120 = vmul.f32 %v1056, 0.25
      %v1121 = vmul.f32 %v1057, 0.25
      %v1122 = vmul.f32 %v1058, 0.25
      %v1123 = vmul.f32 %v1059, 0.25
      %v1124 = vmul.f32 %v1060, 0.25
      %v1125 = vmul.f32 %v1061, 0.25
      %v1126 = vmul.f32 %v1062, 0.25
      %v1127 = vmul.f32 %v1063, 0.25
      %v1128 = vmul.f32 %v1064, 0.25
      %v1129 = vmul.f32 %v1065, 0.25
      %v1130 = vmul.f32 %v1066, 0.25
      %v1131 = vmul.f32 %v1067, 0.25
      %v1132 = vmul.f32 %v1068, 0.25
      %v1133 = vmul.f32 %v1069, 0.25
      %v1134 = vmul.f32 %v1070, 0.25
      %v1135 = vmul.f32 %v1071, 0.25
      %v1136 = vmul.f32 %v1072, 0.25
      %v1137 = vmul.f32 %v1073, 0.25
      %v1138 = vmul.f32 %v1074, 0.25
      %v1139 = vmul.f32 %v1075, 0.25
      %v1140 = vmul.f32 %v1076, 0.25
      %v1141 = vmul.f32 %v1077, 0.25
      %v1142 = vmul.f32 %v1078, 0.25
      %v1143 = vmul.f32 %v1079, 0.25
      %v1144 = vmul.f32 %v1080, 0.25
      %v1145 = vmul.f32 %v1081, 0.25
      %v1146 = vmul.f32 %v1082, 0.25
      %v1147 = vmul.f32 %v1083, 0.25
      %v1148 = vmul.f32 %v1084, 0.25
      %v1149 = vmul.f32 %v1085, 0.25
      %v1150 = vmul.f32 %v1086, 0.25
      %v1151 = vmul.f32 %v1087, 0.25
      %v1152 = vmul.f32 %v1088, 0.25
      %v1153 = vmul.f32 %v1089, 0.25
      %v1154 = vmul.f32 %v1090, 0.25
      %v1155 = vmul.f32 %v1091, 0.25
      %v1156 = vmul.f32 %v1092, 0.25
      %v1157 = vmul.f32 %v1093, 0.25
      %v1158 = vmul.f32 %v1094, 0.25
      %v1159 = vmul.f32 %v1095, 0.25
      %v1160 = vmul.f32 %v1096, 0.25
      %v1161 = vmul.f32 %v1097, 0.25
      %v1162 = vmul.f32 %v1098, 0.25
      %v1163 = vmul.f32 %v1099, 0.25
      %v1164 = vmul.f32 %v1100, 0.25
      %v1165 = vmul.f32 %v1101, 0.25
      %v1166 = vmul.f32 %v1102, 0.25
      %v1167 = vmul.f32 %v1103, 0.25
      %v1168 = vmul.f32 %v1104, 0.25
      %v1169 = vmul.f32 %v1105, 0.25
      %v1170 = vmul.f32 %v1106, 0.25
      %v1171 = vmul.f32 %v1107, 0.25
      %v1172 = vmul.f32 %v1108, 0.25
      %v1173 = vmul.f32 %v1109, 0.25
      %v1174 = vmul.f32 %v1110, 0.25
      %v1175 = vmul.f32 %v1111, 0.25
      %v1176 = vmul.f32 %v1112, 0.25
      %v1177 = vmul.f32 %v1113, 0.25
      %v1178 = vmul.f32 %v1114, 0.25
      %v1179 = vmul.f32 %v1115, 0.25
      %v1180 = vmul.f32 %v1116, 0.25
      %v1181 = vmul.f32 %v1117, 0.25
      %v1182 = vld [vmem:[%s3] sm:$0xff]
      %v1183 = vld [vmem:[%s3 + $0x8] sm:$0xff]
      %v1184 = vld [vmem:[%s3 + $0x10] sm:$0xff]
      %v1185 = vld [vmem:[%s3 + $0x18] sm:$0xff]
      %v1186 = vld [vmem:[%s3 + $0x20] sm:$0xff]
      %v1187 = vld [vmem:[%s3 + $0x28] sm:$0xff]
      %v1188 = vld [vmem:[%s3 + $0x30] sm:$0xff]
      %v1189 = vld [vmem:[%s3 + $0x38] sm:$0xff]
      %v1190 = vld [vmem:[%s3 + $0x40] sm:$0xff]
      %v1191 = vld [vmem:[%s3 + $0x48] sm:$0xff]
      %v1192 = vld [vmem:[%s3 + $0x50] sm:$0xff]
      %v1193 = vld [vmem:[%s3 + $0x58] sm:$0xff]
      %v1194 = vld [vmem:[%s3 + $0x60] sm:$0xff]
      %v1195 = vld [vmem:[%s3 + $0x68] sm:$0xff]
      %v1196 = vld [vmem:[%s3 + $0x70] sm:$0xff]
      %v1197 = vld [vmem:[%s3 + $0x78] sm:$0xff]
      %v1262 = vperm.slane %v1118, 0
      %v1263 = vperm.slane %v1119, 0
      %v1264 = vperm.slane %v1120, 0
      %v1265 = vperm.slane %v1121, 0
      %v1266 = vperm.slane %v1122, 0
      %v1267 = vperm.slane %v1123, 0
      %v1268 = vperm.slane %v1124, 0
      %v1269 = vperm.slane %v1125, 0
      %v1270 = vperm.slane %v1126, 0
      %v1271 = vperm.slane %v1127, 0
      %v1272 = vperm.slane %v1128, 0
      %v1273 = vperm.slane %v1129, 0
      %v1274 = vperm.slane %v1130, 0
      %v1275 = vperm.slane %v1131, 0
      %v1276 = vperm.slane %v1132, 0
      %v1277 = vperm.slane %v1133, 0
      %v1278 = vperm.slane %v1134, 0
      %v1279 = vperm.slane %v1135, 0
      %v1280 = vperm.slane %v1136, 0
      %v1281 = vperm.slane %v1137, 0
      %v1282 = vperm.slane %v1138, 0
      %v1283 = vperm.slane %v1139, 0
      %v1284 = vperm.slane %v1140, 0
      %v1285 = vperm.slane %v1141, 0
      %v1286 = vperm.slane %v1142, 0
      %v1287 = vperm.slane %v1143, 0
      %v1288 = vperm.slane %v1144, 0
      %v1289 = vperm.slane %v1145, 0
      %v1290 = vperm.slane %v1146, 0
      %v1291 = vperm.slane %v1147, 0
      %v1292 = vperm.slane %v1148, 0
      %v1293 = vperm.slane %v1149, 0
      %v1294 = vperm.slane %v1150, 0
      %v1295 = vperm.slane %v1151, 0
      %v1296 = vperm.slane %v1152, 0
      %v1297 = vperm.slane %v1153, 0
      %v1298 = vperm.slane %v1154, 0
      %v1299 = vperm.slane %v1155, 0
      %v1300 = vperm.slane %v1156, 0
      %v1301 = vperm.slane %v1157, 0
      %v1302 = vperm.slane %v1158, 0
      %v1303 = vperm.slane %v1159, 0
      %v1304 = vperm.slane %v1160, 0
      %v1305 = vperm.slane %v1161, 0
      %v1306 = vperm.slane %v1162, 0
      %v1307 = vperm.slane %v1163, 0
      %v1308 = vperm.slane %v1164, 0
      %v1309 = vperm.slane %v1165, 0
      %v1310 = vperm.slane %v1166, 0
      %v1311 = vperm.slane %v1167, 0
      %v1312 = vperm.slane %v1168, 0
      %v1313 = vperm.slane %v1169, 0
      %v1314 = vperm.slane %v1170, 0
      %v1315 = vperm.slane %v1171, 0
      %v1316 = vperm.slane %v1172, 0
      %v1317 = vperm.slane %v1173, 0
      %v1318 = vperm.slane %v1174, 0
      %v1319 = vperm.slane %v1175, 0
      %v1320 = vperm.slane %v1176, 0
      %v1321 = vperm.slane %v1177, 0
      %v1322 = vperm.slane %v1178, 0
      %v1323 = vperm.slane %v1179, 0
      %v1324 = vperm.slane %v1180, 0
      %v1325 = vperm.slane %v1181, 0
      %vm1326 = vcmask 1041409
      %v1327 = vsel %vm1326, %v1263, %v1262
      %vm1328 = vcmask 1042434
      %v1329 = vsel %vm1328, %v1264, %v1327
      %vm1330 = vcmask 1043459
      %v1331 = vsel %vm1330, %v1265, %v1329
      %vm1332 = vcmask 1044484
      %v1333 = vsel %vm1332, %v1266, %v1331
      %vm1334 = vcmask 1045509
      %v1335 = vsel %vm1334, %v1267, %v1333
      %vm1336 = vcmask 1046534
      %v1337 = vsel %vm1336, %v1268, %v1335
      %vm1338 = vcmask 1047559
      %v1339 = vsel %vm1338, %v1269, %v1337
      %v1340 = vsel %vm1326, %v1271, %v1270
      %v1341 = vsel %vm1328, %v1272, %v1340
      %v1342 = vsel %vm1330, %v1273, %v1341
      %v1343 = vsel %vm1332, %v1274, %v1342
      %v1344 = vsel %vm1334, %v1275, %v1343
      %v1345 = vsel %vm1336, %v1276, %v1344
      %v1346 = vsel %vm1338, %v1277, %v1345
      %v1347 = vsel %vm1326, %v1279, %v1278
      %v1348 = vsel %vm1328, %v1280, %v1347
      %v1349 = vsel %vm1330, %v1281, %v1348
      %v1350 = vsel %vm1332, %v1282, %v1349
      %v1351 = vsel %vm1334, %v1283, %v1350
      %v1352 = vsel %vm1336, %v1284, %v1351
      %v1353 = vsel %vm1338, %v1285, %v1352
      %v1354 = vsel %vm1326, %v1287, %v1286
      %v1355 = vsel %vm1328, %v1288, %v1354
      %v1356 = vsel %vm1330, %v1289, %v1355
      %v1357 = vsel %vm1332, %v1290, %v1356
      %v1358 = vsel %vm1334, %v1291, %v1357
      %v1359 = vsel %vm1336, %v1292, %v1358
      %v1360 = vsel %vm1338, %v1293, %v1359
      %v1361 = vsel %vm1326, %v1295, %v1294
      %v1362 = vsel %vm1328, %v1296, %v1361
      %v1363 = vsel %vm1330, %v1297, %v1362
      %v1364 = vsel %vm1332, %v1298, %v1363
      %v1365 = vsel %vm1334, %v1299, %v1364
      %v1366 = vsel %vm1336, %v1300, %v1365
      %v1367 = vsel %vm1338, %v1301, %v1366
      %v1368 = vsel %vm1326, %v1303, %v1302
      %v1369 = vsel %vm1328, %v1304, %v1368
      %v1370 = vsel %vm1330, %v1305, %v1369
      %v1371 = vsel %vm1332, %v1306, %v1370
      %v1372 = vsel %vm1334, %v1307, %v1371
      %v1373 = vsel %vm1336, %v1308, %v1372
      %v1374 = vsel %vm1338, %v1309, %v1373
      %v1375 = vsel %vm1326, %v1311, %v1310
      %v1376 = vsel %vm1328, %v1312, %v1375
      %v1377 = vsel %vm1330, %v1313, %v1376
      %v1378 = vsel %vm1332, %v1314, %v1377
      %v1379 = vsel %vm1334, %v1315, %v1378
      %v1380 = vsel %vm1336, %v1316, %v1379
      %v1381 = vsel %vm1338, %v1317, %v1380
      %v1382 = vsel %vm1326, %v1319, %v1318
      %v1383 = vsel %vm1328, %v1320, %v1382
      %v1384 = vsel %vm1330, %v1321, %v1383
      %v1385 = vsel %vm1332, %v1322, %v1384
      %v1386 = vsel %vm1334, %v1323, %v1385
      %v1387 = vsel %vm1336, %v1324, %v1386
      %v1388 = vsel %vm1338, %v1325, %v1387
      %vm1389 = vcmask 64512
      %v1391 = vsel %vm1389, %v1182, 0
      %v1394 = vsel %vm1389, %v1183, 0
      %v1397 = vsel %vm1389, %v1184, 0
      %v1400 = vsel %vm1389, %v1185, 0
      %v1403 = vsel %vm1389, %v1186, 0
      %v1406 = vsel %vm1389, %v1187, 0
      %v1409 = vsel %vm1389, %v1188, 0
      %v1412 = vsel %vm1389, %v1189, 0
      %v1415 = vsel %vm1389, %v1190, 0
      %v1418 = vsel %vm1389, %v1191, 0
      %v1421 = vsel %vm1389, %v1192, 0
      %v1424 = vsel %vm1389, %v1193, 0
      %v1427 = vsel %vm1389, %v1194, 0
      %v1430 = vsel %vm1389, %v1195, 0
      %v1433 = vsel %vm1389, %v1196, 0
      %v1436 = vsel %vm1389, %v1197, 0
      %v1438 = vsel %vm1389, %v1339, 0
      %v1440 = vsel %vm1389, %v1346, 0
      %v1442 = vsel %vm1389, %v1353, 0
      %v1444 = vsel %vm1389, %v1360, 0
      %v1446 = vsel %vm1389, %v1367, 0
      %v1448 = vsel %vm1389, %v1374, 0
      %v1450 = vsel %vm1389, %v1381, 0
      %v1452 = vsel %vm1389, %v1388, 0
      %1454 = vmatpush.xpose.msra.mxu0 0.0
      %1455 = vmatpush.xpose.msra.mxu0 0.0
      %1456 = vmatpush.xpose.msra.mxu0 0.0
      %1457 = vmatpush.xpose.msra.mxu0 0.0
      %1458 = vmatpush.xpose.msra.mxu0 0.0
      %1459 = vmatpush.xpose.msra.mxu0 0.0
      %1460 = vmatpush.xpose.msra.mxu0 0.0
      %1461 = vmatpush.xpose.msra.mxu0 0.0
      %1462 = vmatpush.xpose.msra.mxu0 %v1452
      %1463 = vmatpush.xpose.msra.mxu0 %v1450
      %1464 = vmatpush.xpose.msra.mxu0 %v1448
      %1465 = vmatpush.xpose.msra.mxu0 %v1446
      %1466 = vmatpush.xpose.msra.mxu0 %v1444
      %1467 = vmatpush.xpose.msra.mxu0 %v1442
      %1468 = vmatpush.xpose.msra.mxu0 %v1440
      %1469 = vmatpush.xpose.msra.mxu0 %v1438
      %1470 = vmatmul.f32.gmra.mxu0 %v1391
      %v1471 = vpop.f32.mrf.mxu0
      %v1472 = vadd.f32 0.0, %v1471
      %1473 = vmatmul.f32.gmra.mxu0 %v1394
      %v1474 = vpop.f32.mrf.mxu0
      %v1475 = vadd.f32 0.0, %v1474
      %1476 = vmatmul.f32.gmra.mxu0 %v1397
      %v1477 = vpop.f32.mrf.mxu0
      %v1478 = vadd.f32 0.0, %v1477
      %1479 = vmatmul.f32.gmra.mxu0 %v1400
      %v1480 = vpop.f32.mrf.mxu0
      %v1481 = vadd.f32 0.0, %v1480
      %1482 = vmatmul.f32.gmra.mxu0 %v1403
      %v1483 = vpop.f32.mrf.mxu0
      %v1484 = vadd.f32 0.0, %v1483
      %1485 = vmatmul.f32.gmra.mxu0 %v1406
      %v1486 = vpop.f32.mrf.mxu0
      %v1487 = vadd.f32 0.0, %v1486
      %1488 = vmatmul.f32.gmra.mxu0 %v1409
      %v1489 = vpop.f32.mrf.mxu0
      %v1490 = vadd.f32 0.0, %v1489
      %1491 = vmatmul.f32.gmra.mxu0 %v1412
      %v1492 = vpop.f32.mrf.mxu0
      %v1493 = vadd.f32 0.0, %v1492
      %1494 = vmatmul.f32.gmra.mxu0 %v1415
      %v1495 = vpop.f32.mrf.mxu0
      %v1496 = vadd.f32 0.0, %v1495
      %1497 = vmatmul.f32.gmra.mxu0 %v1418
      %v1498 = vpop.f32.mrf.mxu0
      %v1499 = vadd.f32 0.0, %v1498
      %1500 = vmatmul.f32.gmra.mxu0 %v1421
      %v1501 = vpop.f32.mrf.mxu0
      %v1502 = vadd.f32 0.0, %v1501
      %1503 = vmatmul.f32.gmra.mxu0 %v1424
      %v1504 = vpop.f32.mrf.mxu0
      %v1505 = vadd.f32 0.0, %v1504
      %1506 = vmatmul.f32.gmra.mxu0 %v1427
      %v1507 = vpop.f32.mrf.mxu0
      %v1508 = vadd.f32 0.0, %v1507
      %1509 = vmatmul.f32.gmra.mxu0 %v1430
      %v1510 = vpop.f32.mrf.mxu0
      %v1511 = vadd.f32 0.0, %v1510
      %1512 = vmatmul.f32.gmra.mxu0 %v1433
      %v1513 = vpop.f32.mrf.mxu0
      %v1514 = vadd.f32 0.0, %v1513
      %1515 = vmatmul.f32.gmra.mxu0 %v1436
      %v1516 = vpop.f32.mrf.mxu0
      %v1517 = vadd.f32 0.0, %v1516
      %1518 = vdwg.mxu0
      %vm1519 = vcmask 523264
      %1520 = vst.msk [vmem:[%s233] sm:$0xff] %vm1519, %v1472
      %1521 = vst.msk [vmem:[%s233 + $0x8] sm:$0xff] %vm1519, %v1475
      %1522 = vst.msk [vmem:[%s233 + $0x10] sm:$0xff] %vm1519, %v1478
      %1523 = vst.msk [vmem:[%s233 + $0x18] sm:$0xff] %vm1519, %v1481
      %1524 = vst.msk [vmem:[%s233 + $0x20] sm:$0xff] %vm1519, %v1484
      %1525 = vst.msk [vmem:[%s233 + $0x28] sm:$0xff] %vm1519, %v1487
      %1526 = vst.msk [vmem:[%s233 + $0x30] sm:$0xff] %vm1519, %v1490
      %1527 = vst.msk [vmem:[%s233 + $0x38] sm:$0xff] %vm1519, %v1493
      %1528 = vst.msk [vmem:[%s233 + $0x40] sm:$0xff] %vm1519, %v1496
      %1529 = vst.msk [vmem:[%s233 + $0x48] sm:$0xff] %vm1519, %v1499
      %1530 = vst.msk [vmem:[%s233 + $0x50] sm:$0xff] %vm1519, %v1502
      %1531 = vst.msk [vmem:[%s233 + $0x58] sm:$0xff] %vm1519, %v1505
      %1532 = vst.msk [vmem:[%s233 + $0x60] sm:$0xff] %vm1519, %v1508
      %1533 = vst.msk [vmem:[%s233 + $0x68] sm:$0xff] %vm1519, %v1511
      %1534 = vst.msk [vmem:[%s233 + $0x70] sm:$0xff] %vm1519, %v1514
      %1535 = vst.msk [vmem:[%s233 + $0x78] sm:$0xff] %vm1519, %v1517
      %p1536 = scmp.lt.s32.totalorder %s19, 1
      %s1537 = scalar_select %p1536, %s19, 1
      %p1538 = scmp.lt.s32.totalorder %s20, 0
      %s1539 = scalar_select %p1538, %s20, 0
      %s1540 = smul.addr %s1537, 16
      %s1541 = sadd.s32 %s1539, %s1540
      %s1542 = smul.addr %s1541, 8
      %s1543 = scalar_lea.vmem %s4, %s1542
      // Predicated region
      $region37: #{tpu_custom_call.1} parent=35 // pred_check
        %p1544 = pneg %p138
      $region38: #{tpu_custom_call.1} parent=35 // pred_check_branch
        %1546 = sbr.rel (%p1544) target = $region40
      $region39: #{tpu_custom_call.1} parent=35 // pred_region
        _
      $region40: #{tpu_custom_call.1} parent=35 // pred_fallthru
        _
    $region36: #{tpu_custom_call.1} parent=5 // pred_fallthru
      _
    %p1547 = scmp.le.s32.totalorder 2, %s10
    // Predicated region
    $region41: #{tpu_custom_call.1} parent=5 // pred_check
      %p1548 = pneg %p1547
    $region42: #{tpu_custom_call.1} parent=5 // pred_check_branch
      %1550 = sbr.rel (%p1548) target = $region44
    $region43: #{tpu_custom_call.1} parent=5 // pred_region
      %s1551 = ssub.s32 %s10, 2
      // Predicated region
      $region45: #{tpu_custom_call.1} parent=43 // pred_check
        %p1552 = pneg %p144
      $region46: #{tpu_custom_call.1} parent=43 // pred_check_branch
        %1554 = sbr.rel (%p1552) target = $region48
      $region47: #{tpu_custom_call.1} parent=43 // pred_region
        %p1555 = scmp.lt.s32.totalorder %s21, 1
        %s1556 = scalar_select %p1555, %s21, 1
        %p1557 = scmp.lt.s32.totalorder %s22, 0
        %s1558 = scalar_select %p1557, %s22, 0
        %s1559 = smul.addr %s1556, 16
        %s1560 = sadd.s32 %s1558, %s1559
        %s1561 = smul.addr %s1560, 8
        %s1562 = scalar_lea.vmem %s4, %s1561
      $region48: #{tpu_custom_call.1} parent=43 // pred_fallthru
        _
    $region44: #{tpu_custom_call.1} parent=5 // pred_fallthru
      _
  $region6: #{tpu_custom_call.1} parent=0 // loop_footer
    %s14 = sadd.s32 1, %s10
  $region7: #{tpu_custom_call.1} parent=0 // loop_footer_branch
    %9 = sbr.rel target = $region3
  $region8: #{tpu_custom_call.1} parent=0 // loop_exit
    _

</llo_original>
